<compile_context>
chip_gen: v5e
topology: v5e:2x2
jax: 0.10.0
libtpu: 0.0.40
codegen_flags: <defaults>
</compile_context>

<pallas_src>
import jax
import jax.numpy as jnp
from jax.experimental import pallas as pl
from jax.experimental.pallas import tpu as pltpu

HIDDEN = 256
LANE = 128


def _round_up(x, m):
    return (x + m - 1) // m * m


def _cdiv(a, b):
    return -(-a // b)


def actor_kernel(x_ref, w1_ref, b1_ref, w2_ref, b2_ref, w3_ref, b3_ref, o_ref):
    # Matmul operands in the weights' dtype (bf16 by default), f32 accumulate.
    cdt = w1_ref.dtype

    # fc1 + relu  (bias add / relu in f32)
    h = jnp.dot(x_ref[...].astype(cdt), w1_ref[...],
                preferred_element_type=jnp.float32)
    h = jnp.maximum(h + b1_ref[...], 0.0)

    # fc2 + relu
    h = jnp.dot(h.astype(cdt), w2_ref[...],
                preferred_element_type=jnp.float32)
    h = jnp.maximum(h + b2_ref[...], 0.0)

    # fc3 (lane-padded weights for the MXU) + tanh on the narrow head only,
    # stored to a (tm, action_dim) output block -> minimal HBM writeback.
    y = jnp.dot(h.astype(cdt), w3_ref[...],
                preferred_element_type=jnp.float32)
    a_dim = o_ref.shape[-1]
    o_ref[...] = jnp.tanh(y[:, :a_dim] + b3_ref[...]).astype(o_ref.dtype)


def actor_forward(state, params, *, tm=2048, use_bf16=True):
    """state: [B, state_dim] f32. params: dict of [in, out] weights + (1, out) biases."""
    B, state_dim = state.shape
    action_dim = params["w3"].shape[1]

    # --- lane-pad only the fc3 weight to a multiple of 128 for the MXU;
    #     the bias / output stay at action_dim (small HBM writeback). ---
    n_pad = _round_up(action_dim, LANE)
    w3 = jnp.pad(params["w3"], ((0, 0), (0, n_pad - action_dim)))
    w1, b1, w2, b2, b3 = (params["w1"], params["b1"], params["w2"],
                          params["b2"], params["b3"])

    if use_bf16:
        w1, w2, w3 = (w.astype(jnp.bfloat16) for w in (w1, w2, w3))

    # --- batch tile: multiple of 8 sublanes, >=2 grid steps when B > 8 so both
    #     v7x TensorCores get work; capped at 4096 rows (v7x 64 MiB VMEM). ---
    if B <= 8:
        tm_eff = B                      # single block equal to the full dim
    else:
        half = _round_up(_cdiv(B, 2), 8)
        tm_eff = max(8, min(tm, 4096, half))
    grid = _cdiv(B, tm_eff)             # ragged last block handled by Pallas

    resident = lambda i: (0, 0)         # weights/biases: same block every grid step
    tiled = lambda i: (i, 0)            # activations: walk the batch axis

    wbytes = sum(int(a.size) * a.dtype.itemsize for a in (w1, b1, w2, b2, w3, b3))
    cost = pl.CostEstimate(
        flops=2 * B * (state_dim * HIDDEN + HIDDEN * HIDDEN + HIDDEN * n_pad),
        transcendentals=B * action_dim,
        bytes_accessed=B * state_dim * 4 + wbytes + B * action_dim * 4,
    )

    out = pl.pallas_call(
        actor_kernel,
        out_shape=jax.ShapeDtypeStruct((B, action_dim), jnp.float32),
        grid_spec=pltpu.PrefetchScalarGridSpec(
            num_scalar_prefetch=0,
            grid=(grid,),
            in_specs=[
                pl.BlockSpec((tm_eff, state_dim), tiled),
                pl.BlockSpec(w1.shape, resident),
                pl.BlockSpec(b1.shape, resident),
                pl.BlockSpec(w2.shape, resident),
                pl.BlockSpec(b2.shape, resident),
                pl.BlockSpec(w3.shape, resident),
                pl.BlockSpec(b3.shape, resident),
            ],
            out_specs=pl.BlockSpec((tm_eff, action_dim), tiled),
        ),
        compiler_params=pltpu.CompilerParams(
            dimension_semantics=("parallel",),
            vmem_limit_bytes=32 * 1024 * 1024,
        ),
        cost_estimate=cost,
    )(state, w1, b1, w2, b2, w3, b3)

    return out


def xavier_uniform(key, fan_in, fan_out, dtype=jnp.float32):
    # Matches torch.nn.init.xavier_uniform_ (gain=1).
    limit = (6.0 / (fan_in + fan_out)) ** 0.5
    return jax.random.uniform(
        key, (fan_in, fan_out), dtype=dtype, minval=-limit, maxval=limit
    )


def init_actor_params(key, state_dim, action_dim):
    k1, k2, k3 = jax.random.split(key, 3)
    return {
        "w1": xavier_uniform(k1, state_dim, HIDDEN),
        "b1": jnp.zeros((1, HIDDEN), jnp.float32),
        "w2": xavier_uniform(k2, HIDDEN, HIDDEN),
        "b2": jnp.zeros((1, HIDDEN), jnp.float32),
        "w3": xavier_uniform(k3, HIDDEN, action_dim),
        "b3": jnp.zeros((1, action_dim), jnp.float32),
    }


def actor_reference(state, params, use_bf16=True):
    cdt = jnp.bfloat16 if use_bf16 else jnp.float32

    def mm(x, w):
        return jnp.dot(x.astype(cdt), w.astype(cdt),
                       preferred_element_type=jnp.float32)

    h = jnp.maximum(mm(state, params["w1"]) + params["b1"], 0.0)
    h = jnp.maximum(mm(h, params["w2"]) + params["b2"], 0.0)
    return jnp.tanh(mm(h, params["w3"]) + params["b3"])


if __name__ == "__main__":
    key = jax.random.PRNGKey(0)
    k_params, k_state, k_state2 = jax.random.split(key, 3)

    batch, state_dim, action_dim = 2, 16, 8
    params = init_actor_params(k_params, state_dim, action_dim)
    state = jax.random.normal(k_state, (batch, state_dim), dtype=jnp.float32)

    out = jax.block_until_ready(actor_forward(state, params))
    assert out.shape == (batch, action_dim)
    # Match-regime check against a bf16-operand / f32-accum reference.
    assert jnp.allclose(out, actor_reference(state, params, use_bf16=True),
                        atol=1e-3, rtol=1e-3)
    # Sanity check against the pure-f32 PyTorch-equivalent forward.
    assert jnp.allclose(out, actor_reference(state, params, use_bf16=False),
                        atol=5e-2, rtol=5e-2)

    # Second case: non-multiple batch -> multiple grid tiles + ragged last block.
    batch2 = 300
    state2 = jax.random.normal(k_state2, (batch2, state_dim), dtype=jnp.float32)
    out2 = jax.block_until_ready(actor_forward(state2, params, tm=128))
    assert out2.shape == (batch2, action_dim)
    assert jnp.allclose(out2, actor_reference(state2, params, use_bf16=True),
                        atol=1e-3, rtol=1e-3)

    print("KERNEL_OK")
</pallas_src>

<mosaic_0001>
module attributes {stable_mosaic.version = 11 : i64} {
  func.func @actor_kernel(%arg0: i32, %arg1: memref<2x16xf32, #tpu.memory_space<vmem>>, %arg2: memref<16x256xbf16, #tpu.memory_space<vmem>>, %arg3: memref<1x256xf32, #tpu.memory_space<vmem>>, %arg4: memref<256x256xbf16, #tpu.memory_space<vmem>>, %arg5: memref<1x256xf32, #tpu.memory_space<vmem>>, %arg6: memref<256x128xbf16, #tpu.memory_space<vmem>>, %arg7: memref<1x8xf32, #tpu.memory_space<vmem>>, %arg8: memref<2x8xf32, #tpu.memory_space<vmem>>) attributes {dimension_semantics = [#tpu.dimension_semantics<parallel>], iteration_bounds = array<i64: 1>, scalar_prefetch = 0 : i64, scratch_operands = 0 : i64, tpu.core_type = #tpu.core_type<tc>, window_params = [{transform_indices = @transform_0, window_bounds = array<i64: 2, 16>}, {pipeline_mode = #tpu.pipeline_mode<synchronous>, transform_indices = @transform_1, window_bounds = array<i64: 16, 256>}, {pipeline_mode = #tpu.pipeline_mode<synchronous>, transform_indices = @transform_2, window_bounds = array<i64: 1, 256>}, {pipeline_mode = #tpu.pipeline_mode<synchronous>, transform_indices = @transform_3, window_bounds = array<i64: 256, 256>}, {pipeline_mode = #tpu.pipeline_mode<synchronous>, transform_indices = @transform_4, window_bounds = array<i64: 1, 256>}, {pipeline_mode = #tpu.pipeline_mode<synchronous>, transform_indices = @transform_5, window_bounds = array<i64: 256, 128>}, {pipeline_mode = #tpu.pipeline_mode<synchronous>, transform_indices = @transform_6, window_bounds = array<i64: 1, 8>}, {transform_indices = @transform_7, window_bounds = array<i64: 2, 8>}]} {
    %c0 = arith.constant 0 : index
    %c0_0 = arith.constant 0 : index
    %0 = vector.load %arg1[%c0, %c0_0] : memref<2x16xf32, #tpu.memory_space<vmem>>, vector<2x16xf32>
    %1 = arith.truncf %0 : vector<2x16xf32> to vector<2x16xbf16>
    %c0_1 = arith.constant 0 : index
    %c0_2 = arith.constant 0 : index
    %2 = vector.load %arg2[%c0_1, %c0_2] : memref<16x256xbf16, #tpu.memory_space<vmem>>, vector<16x256xbf16>
    %cst = arith.constant dense<0.000000e+00> : vector<2x256xf32>
    %3 = tpu.matmul %1, %2, %cst {dimension_numbers = #tpu.dot_dimension_numbers<[1], [0], [0], [1], [0, 0, 1, 1], [], []>} : vector<2x16xbf16>, vector<16x256xbf16>, vector<2x256xf32> -> vector<2x256xf32>
    %c0_3 = arith.constant 0 : index
    %c0_4 = arith.constant 0 : index
    %4 = vector.load %arg3[%c0_3, %c0_4] : memref<1x256xf32, #tpu.memory_space<vmem>>, vector<1x256xf32>
    %5 = vector.broadcast %4 : vector<1x256xf32> to vector<2x256xf32>
    %6 = arith.addf %3, %5 : vector<2x256xf32>
    %cst_5 = arith.constant 0.000000e+00 : f32
    %7 = vector.broadcast %cst_5 : f32 to vector<2x256xf32>
    %8 = arith.maximumf %6, %7 : vector<2x256xf32>
    %9 = arith.truncf %8 : vector<2x256xf32> to vector<2x256xbf16>
    %c0_6 = arith.constant 0 : index
    %c0_7 = arith.constant 0 : index
    %10 = vector.load %arg4[%c0_6, %c0_7] : memref<256x256xbf16, #tpu.memory_space<vmem>>, vector<256x256xbf16>
    %cst_8 = arith.constant dense<0.000000e+00> : vector<2x256xf32>
    %11 = tpu.matmul %9, %10, %cst_8 {dimension_numbers = #tpu.dot_dimension_numbers<[1], [0], [0], [1], [0, 0, 1, 1], [], []>} : vector<2x256xbf16>, vector<256x256xbf16>, vector<2x256xf32> -> vector<2x256xf32>
    %c0_9 = arith.constant 0 : index
    %c0_10 = arith.constant 0 : index
    %12 = vector.load %arg5[%c0_9, %c0_10] : memref<1x256xf32, #tpu.memory_space<vmem>>, vector<1x256xf32>
    %13 = vector.broadcast %12 : vector<1x256xf32> to vector<2x256xf32>
    %14 = arith.addf %11, %13 : vector<2x256xf32>
    %cst_11 = arith.constant 0.000000e+00 : f32
    %15 = vector.broadcast %cst_11 : f32 to vector<2x256xf32>
    %16 = arith.maximumf %14, %15 : vector<2x256xf32>
    %17 = arith.truncf %16 : vector<2x256xf32> to vector<2x256xbf16>
    %c0_12 = arith.constant 0 : index
    %c0_13 = arith.constant 0 : index
    %18 = vector.load %arg6[%c0_12, %c0_13] : memref<256x128xbf16, #tpu.memory_space<vmem>>, vector<256x128xbf16>
    %cst_14 = arith.constant dense<0.000000e+00> : vector<2x128xf32>
    %19 = tpu.matmul %17, %18, %cst_14 {dimension_numbers = #tpu.dot_dimension_numbers<[1], [0], [0], [1], [0, 0, 1, 1], [], []>} : vector<2x256xbf16>, vector<256x128xbf16>, vector<2x128xf32> -> vector<2x128xf32>
    %20 = vector.extract_strided_slice %19 {offsets = [0, 0], sizes = [2, 8], strides = [1, 1]} : vector<2x128xf32> to vector<2x8xf32>
    %c0_15 = arith.constant 0 : index
    %c0_16 = arith.constant 0 : index
    %21 = vector.load %arg7[%c0_15, %c0_16] : memref<1x8xf32, #tpu.memory_space<vmem>>, vector<1x8xf32>
    %22 = vector.broadcast %21 : vector<1x8xf32> to vector<2x8xf32>
    %23 = arith.addf %20, %22 : vector<2x8xf32>
    %24 = math.tanh %23 : vector<2x8xf32>
    %c0_17 = arith.constant 0 : index
    %c0_18 = arith.constant 0 : index
    %25 = vector.load %arg8[%c0_17, %c0_18] : memref<2x8xf32, #tpu.memory_space<vmem>>, vector<2x8xf32>
    tpu.vector_store %arg8[%c0_17, %c0_18], %24 {strides = array<i32>} : memref<2x8xf32, #tpu.memory_space<vmem>>, vector<2x8xf32>,
    return
  }
  func.func @transform_0(%arg0: i32) -> (i32, i32) {
    %c0_i32 = arith.constant 0 : i32
    %c0_i32_0 = arith.constant 0 : i32
    return %arg0, %c0_i32 : i32, i32
  }
  func.func @transform_1(%arg0: i32) -> (i32, i32) {
    %c0_i32 = arith.constant 0 : i32
    %c0_i32_0 = arith.constant 0 : i32
    %c0_i32_1 = arith.constant 0 : i32
    return %c0_i32, %c0_i32_0 : i32, i32
  }
  func.func @transform_2(%arg0: i32) -> (i32, i32) {
    %c0_i32 = arith.constant 0 : i32
    %c0_i32_0 = arith.constant 0 : i32
    %c0_i32_1 = arith.constant 0 : i32
    return %c0_i32, %c0_i32_0 : i32, i32
  }
  func.func @transform_3(%arg0: i32) -> (i32, i32) {
    %c0_i32 = arith.constant 0 : i32
    %c0_i32_0 = arith.constant 0 : i32
    %c0_i32_1 = arith.constant 0 : i32
    return %c0_i32, %c0_i32_0 : i32, i32
  }
  func.func @transform_4(%arg0: i32) -> (i32, i32) {
    %c0_i32 = arith.constant 0 : i32
    %c0_i32_0 = arith.constant 0 : i32
    %c0_i32_1 = arith.constant 0 : i32
    return %c0_i32, %c0_i32_0 : i32, i32
  }
  func.func @transform_5(%arg0: i32) -> (i32, i32) {
    %c0_i32 = arith.constant 0 : i32
    %c0_i32_0 = arith.constant 0 : i32
    %c0_i32_1 = arith.constant 0 : i32
    return %c0_i32, %c0_i32_0 : i32, i32
  }
  func.func @transform_6(%arg0: i32) -> (i32, i32) {
    %c0_i32 = arith.constant 0 : i32
    %c0_i32_0 = arith.constant 0 : i32
    %c0_i32_1 = arith.constant 0 : i32
    return %c0_i32, %c0_i32_0 : i32, i32
  }
  func.func @transform_7(%arg0: i32) -> (i32, i32) {
    %c0_i32 = arith.constant 0 : i32
    %c0_i32_0 = arith.constant 0 : i32
    return %arg0, %c0_i32 : i32, i32
  }
}

</mosaic_0001>

<llo_original>
// kernel: tpu_custom_call.1
$region0: #{tpu_custom_call.1}
  #allocation0 [shape = 'u32[]', space=smem, size = 0x4, offset = 0x4, fixed_abs, tag = 'smem constant byte address 0x4 - core index']
  #allocation1 [shape = 'u32[72,128]{1,0:T(1,128)}', space=vmem, size = 0x9000, scoped, tag = 'internal scratch']
  %s0 = inlined_call_operand.hbm [shape: f32[2,16], index: 0, kind: input, shape index: {}]
  %s1 = inlined_call_operand.hbm [shape: bf16[16,256], index: 1, kind: input, shape index: {}]
  %s2 = inlined_call_operand.hbm [shape: f32[1,256], index: 2, kind: input, shape index: {}]
  %s3 = inlined_call_operand.hbm [shape: bf16[256,256], index: 3, kind: input, shape index: {}]
  %s4 = inlined_call_operand.vmem [shape: f32[1,256], index: 4, kind: input, shape index: {}]
  %s5 = inlined_call_operand.hbm [shape: bf16[256,128], index: 5, kind: input, shape index: {}]
  %s6 = inlined_call_operand.vmem [shape: f32[1,8], index: 6, kind: input, shape index: {}]
  %s7 = inlined_call_operand.hbm [shape: f32[2,8], index: 7, kind: output, shape index: {}]
  %s8 = sld [smem:[#allocation0]]
  $region58: #{tpu_custom_call.1} parent=0
    _
  %s10 = ssub.s32 1, %s8
  %s11 = scalar_select 0, %s10, %s8
  $region1: #{tpu_custom_call.1} parent=0
    #allocation2 [shape = 'u8[1024]{0}', space=vmem, size = 0x400, scoped, tag = 'input window, operand 0, single buffered']
    #allocation3 [shape = 's32[1]{0}', space=sflag, size = 0x4, scoped, tag = 'scoped memory for tpu_custom_call.1']
    #allocation4 [shape = 's32[1]{0}', space=sflag, size = 0x4, scoped, tag = 'scoped memory for tpu_custom_call.1']
    #allocation5 [shape = 'u8[8192]{0}', space=vmem, size = 0x2000, scoped, tag = 'input window, operand 1, single buffered']
    #allocation6 [shape = 's32[1]{0}', space=sflag, size = 0x4, scoped, tag = 'scoped memory for tpu_custom_call.1']
    #allocation7 [shape = 'u8[1024]{0}', space=vmem, size = 0x400, scoped, tag = 'input window, operand 2, single buffered']
    #allocation8 [shape = 'u8[131072]{0}', space=vmem, size = 0x20000, scoped, tag = 'input window, operand 3, single buffered']
    #allocation9 [shape = 's32[1]{0}', space=sflag, size = 0x4, scoped, tag = 'scoped memory for tpu_custom_call.1']
    #allocation10 [shape = 'u8[65536]{0}', space=vmem, size = 0x10000, scoped, tag = 'input window, operand 5, single buffered']
    #allocation11 [shape = 'u8[1024]{0}', space=vmem, size = 0x400, scoped, tag = 'output window, operand 0, single buffered']
    %12 = vsyncpa [#allocation3], 0
    %13 = vsyncpa [#allocation6], 0
    %14 = vsyncpa [#allocation9], 0
    %15 = vsyncpa [#allocation4], 0
    // Predicated region
    $region2: #{tpu_custom_call.1} parent=1 // pred_check
      _
    $region3: #{tpu_custom_call.1} parent=1 // pred_check_branch
      %17 = sbr.rel (0) target = $region5
    $region4: #{tpu_custom_call.1} parent=1 // pred_region
      %19 = vsyncadd [#allocation3], 0
      %s21 = sshll.u32 %s0, 4
      %s22 = int_to_ptr.hbm [resolvable:$true] %s21
      %s23 = sshll.u32 [#allocation2], 4
      %s24 = int_to_ptr.vmem [resolvable:$true] %s23
      %26 = dma.hbm_to_vmem [thread:$0]  %s22, 32, %s24, [#allocation3]
    $region5: #{tpu_custom_call.1} parent=1 // pred_fallthru
      _
    // Predicated region
    $region6: #{tpu_custom_call.1} parent=1 // pred_check
      _
    $region7: #{tpu_custom_call.1} parent=1 // pred_check_branch
      %28 = sbr.rel (0) target = $region9
    $region8: #{tpu_custom_call.1} parent=1 // pred_region
      %30 = vsyncadd [#allocation6], 0
      %s31 = sshll.u32 %s1, 4
      %s32 = int_to_ptr.hbm [resolvable:$true] %s31
      %s33 = sshll.u32 [#allocation5], 4
      %s34 = int_to_ptr.vmem [resolvable:$true] %s33
      %39 = dma.hbm_to_vmem [thread:$0]  %s32, 256, %s34, [#allocation6], 128, 128, 8
    $region9: #{tpu_custom_call.1} parent=1 // pred_fallthru
      _
    // Predicated region
    $region10: #{tpu_custom_call.1} parent=1 // pred_check
      _
    $region11: #{tpu_custom_call.1} parent=1 // pred_check_branch
      %41 = sbr.rel (0) target = $region13
    $region12: #{tpu_custom_call.1} parent=1 // pred_region
      %43 = vsyncadd [#allocation6], 0
      %s45 = sshll.u32 %s2, 4
      %s46 = int_to_ptr.hbm [resolvable:$true] %s45
      %s47 = sshll.u32 [#allocation7], 4
      %s48 = int_to_ptr.vmem [resolvable:$true] %s47
      %50 = dma.hbm_to_vmem [thread:$0]  %s46, 32, %s48, [#allocation6]
    $region13: #{tpu_custom_call.1} parent=1 // pred_fallthru
      _
    // Predicated region
    $region14: #{tpu_custom_call.1} parent=1 // pred_check
      _
    $region15: #{tpu_custom_call.1} parent=1 // pred_check_branch
      %52 = sbr.rel (0) target = $region17
    $region16: #{tpu_custom_call.1} parent=1 // pred_region
      %54 = vsyncadd [#allocation9], 0
      %s55 = sshll.u32 %s3, 4
      %s56 = int_to_ptr.hbm [resolvable:$true] %s55
      %s57 = sshll.u32 [#allocation8], 4
      %s58 = int_to_ptr.vmem [resolvable:$true] %s57
      %63 = dma.hbm_to_vmem [thread:$0]  %s56, 4096, %s58, [#allocation9], 128, 128, 8
    $region17: #{tpu_custom_call.1} parent=1 // pred_fallthru
      _
    // Predicated region
    $region18: #{tpu_custom_call.1} parent=1 // pred_check
      _
    $region19: #{tpu_custom_call.1} parent=1 // pred_check_branch
      %65 = sbr.rel (0) target = $region21
    $region20: #{tpu_custom_call.1} parent=1 // pred_region
      _
    $region21: #{tpu_custom_call.1} parent=1 // pred_fallthru
      _
    // Predicated region
    $region22: #{tpu_custom_call.1} parent=1 // pred_check
      _
    $region23: #{tpu_custom_call.1} parent=1 // pred_check_branch
      %67 = sbr.rel (0) target = $region25
    $region24: #{tpu_custom_call.1} parent=1 // pred_region
      %69 = vsyncadd [#allocation9], 0
      %s70 = sshll.u32 %s5, 4
      %s71 = int_to_ptr.hbm [resolvable:$true] %s70
      %s72 = sshll.u32 [#allocation10], 4
      %s73 = int_to_ptr.vmem [resolvable:$true] %s72
      %78 = dma.hbm_to_vmem [thread:$0]  %s71, 2048, %s73, [#allocation9], 64, 64, 4
    $region25: #{tpu_custom_call.1} parent=1 // pred_fallthru
      _
    // Predicated region
    $region26: #{tpu_custom_call.1} parent=1 // pred_check
      _
    $region27: #{tpu_custom_call.1} parent=1 // pred_check_branch
      %80 = sbr.rel (0) target = $region29
    $region28: #{tpu_custom_call.1} parent=1 // pred_region
      _
    $region29: #{tpu_custom_call.1} parent=1 // pred_fallthru
      _
    // Predicated region
    $region30: #{tpu_custom_call.1} parent=1 // pred_check
      _
    $region31: #{tpu_custom_call.1} parent=1 // pred_check_branch
      %82 = sbr.rel (0) target = $region33
    $region32: #{tpu_custom_call.1} parent=1 // pred_region
      %84 = dma.done [#allocation3], 32
    $region33: #{tpu_custom_call.1} parent=1 // pred_fallthru
      _
    // Predicated region
    $region34: #{tpu_custom_call.1} parent=1 // pred_check
      _
    $region35: #{tpu_custom_call.1} parent=1 // pred_check_branch
      %86 = sbr.rel (0) target = $region37
    $region36: #{tpu_custom_call.1} parent=1 // pred_region
      %88 = dma.done [#allocation6], 256
    $region37: #{tpu_custom_call.1} parent=1 // pred_fallthru
      _
    // Predicated region
    $region38: #{tpu_custom_call.1} parent=1 // pred_check
      _
    $region39: #{tpu_custom_call.1} parent=1 // pred_check_branch
      %90 = sbr.rel (0) target = $region41
    $region40: #{tpu_custom_call.1} parent=1 // pred_region
      %92 = dma.done [#allocation6], 32
    $region41: #{tpu_custom_call.1} parent=1 // pred_fallthru
      _
    // Predicated region
    $region42: #{tpu_custom_call.1} parent=1 // pred_check
      _
    $region43: #{tpu_custom_call.1} parent=1 // pred_check_branch
      %94 = sbr.rel (0) target = $region45
    $region44: #{tpu_custom_call.1} parent=1 // pred_region
      %96 = dma.done [#allocation9], 4096
    $region45: #{tpu_custom_call.1} parent=1 // pred_fallthru
      _
    // Predicated region
    $region46: #{tpu_custom_call.1} parent=1 // pred_check
      _
    $region47: #{tpu_custom_call.1} parent=1 // pred_check_branch
      %98 = sbr.rel (0) target = $region49
    $region48: #{tpu_custom_call.1} parent=1 // pred_region
      %100 = dma.done [#allocation9], 2048
    $region49: #{tpu_custom_call.1} parent=1 // pred_fallthru
      _
    %v102 = vld [vmem:[#allocation2] sm:$0x3]
    %v103 = vpack.c.bf16 %v102, %v102
    %v104 = vld [vmem:[#allocation5] sm:$0xff]
    %v105 = vld [vmem:[#allocation5 + $0x8] sm:$0xff]
    %v106 = vld [vmem:[#allocation7] sm:$0x3]
    %v108 = vperm.slane %v106, 0
    %v109 = vperm.slane %v106, 1
    %v114 = vunpack.c.l.b16 %v104
    %v115 = vunpack.c.h.b16 %v104
    %v116 = vunpack.c.l.b16 %v105
    %v117 = vunpack.c.h.b16 %v105
    %v118 = vpack.c.b16 %v116, %v114
    %v119 = vpack.c.b16 %v117, %v115
    %vm122 = vcmask 130048
    %v124 = vsel %vm122, %v103, 0
    %126 = vmatpush.bf16.msra.mxu0 0
    %127 = vmatpush.bf16.msra.mxu0 0
    %128 = vmatpush.bf16.msra.mxu0 0
    %129 = vmatpush.bf16.msra.mxu0 0
    %130 = vmatpush.bf16.msra.mxu0 0
    %131 = vmatpush.bf16.msra.mxu0 0
    %132 = vmatpush.bf16.msra.mxu0 0
    %133 = vmatpush.bf16.msra.mxu0 %v118
    %134 = vmatmul.bf16.gmra.mxu0 %v124
    %v135 = vpop.f32.mrf.mxu0
    %v136 = vadd.f32 %v108, %v135
    %v137 = vpop.f32.mrf.mxu0
    %138 = vdwg.mxu0
    %139 = vmatpush.bf16.msra.mxu0 0
    %140 = vmatpush.bf16.msra.mxu0 0
    %141 = vmatpush.bf16.msra.mxu0 0
    %142 = vmatpush.bf16.msra.mxu0 0
    %143 = vmatpush.bf16.msra.mxu0 0
    %144 = vmatpush.bf16.msra.mxu0 0
    %145 = vmatpush.bf16.msra.mxu0 0
    %146 = vmatpush.bf16.msra.mxu0 %v119
    %147 = vmatmul.bf16.gmra.mxu0 %v124
    %v148 = vpop.f32.mrf.mxu0
    %v149 = vadd.f32 %v109, %v148
    %v150 = vpop.f32.mrf.mxu0
    %151 = vdwg.mxu0
    %v152 = vmax.f32 %v136, 0.0
    %v153 = vmax.f32 %v149, 0.0
    %v154 = vpack.c.bf16 %v152, %v152
    %v155 = vpack.c.bf16 %v153, %v153
    %v156 = vld [vmem:[#allocation8] sm:$0xff]
    %v157 = vld [vmem:[#allocation8 + $0x8] sm:$0xff]
    %v158 = vld [vmem:[#allocation8 + $0x10] sm:$0xff]
    %v159 = vld [vmem:[#allocation8 + $0x18] sm:$0xff]
    %v160 = vld [vmem:[#allocation8 + $0x20] sm:$0xff]
    %v161 = vld [vmem:[#allocation8 + $0x28] sm:$0xff]
    %v162 = vld [vmem:[#allocation8 + $0x30] sm:$0xff]
    %v163 = vld [vmem:[#allocation8 + $0x38] sm:$0xff]
    %v164 = vld [vmem:[#allocation8 + $0x40] sm:$0xff]
    %v165 = vld [vmem:[#allocation8 + $0x48] sm:$0xff]
    %v166 = vld [vmem:[#allocation8 + $0x50] sm:$0xff]
    %v167 = vld [vmem:[#allocation8 + $0x58] sm:$0xff]
    %v168 = vld [vmem:[#allocation8 + $0x60] sm:$0xff]
    %v169 = vld [vmem:[#allocation8 + $0x68] sm:$0xff]
    %v170 = vld [vmem:[#allocation8 + $0x70] sm:$0xff]
    %v171 = vld [vmem:[#allocation8 + $0x78] sm:$0xff]
    %v172 = vld [vmem:[#allocation8 + $0x80] sm:$0xff]
    %v173 = vld [vmem:[#allocation8 + $0x88] sm:$0xff]
    %v174 = vld [vmem:[#allocation8 + $0x90] sm:$0xff]
    %v175 = vld [vmem:[#allocation8 + $0x98] sm:$0xff]
    %v176 = vld [vmem:[#allocation8 + $0xa0] sm:$0xff]
    %v177 = vld [vmem:[#allocation8 + $0xa8] sm:$0xff]
    %v178 = vld [vmem:[#allocation8 + $0xb0] sm:$0xff]
    %v179 = vld [vmem:[#allocation8 + $0xb8] sm:$0xff]
    %v180 = vld [vmem:[#allocation8 + $0xc0] sm:$0xff]
    %v181 = vld [vmem:[#allocation8 + $0xc8] sm:$0xff]
    %v182 = vld [vmem:[#allocation8 + $0xd0] sm:$0xff]
    %v183 = vld [vmem:[#allocation8 + $0xd8] sm:$0xff]
    %v184 = vld [vmem:[#allocation8 + $0xe0] sm:$0xff]
    %v185 = vld [vmem:[#allocation8 + $0xe8] sm:$0xff]
    %v186 = vld [vmem:[#allocation8 + $0xf0] sm:$0xff]
    %v187 = vld [vmem:[#allocation8 + $0xf8] sm:$0xff]
    %v188 = vld [vmem:[%s4] sm:$0x3]
    %v190 = vperm.slane %v188, 0
    %v191 = vperm.slane %v188, 1
    %v226 = vunpack.c.l.b16 %v156
    %v227 = vunpack.c.h.b16 %v156
    %v228 = vunpack.c.l.b16 %v157
    %v229 = vunpack.c.h.b16 %v157
    %v230 = vunpack.c.l.b16 %v158
    %v231 = vunpack.c.h.b16 %v158
    %v232 = vunpack.c.l.b16 %v159
    %v233 = vunpack.c.h.b16 %v159
    %v234 = vunpack.c.l.b16 %v160
    %v235 = vunpack.c.h.b16 %v160
    %v236 = vunpack.c.l.b16 %v161
    %v237 = vunpack.c.h.b16 %v161
    %v238 = vunpack.c.l.b16 %v162
    %v239 = vunpack.c.h.b16 %v162
    %v240 = vunpack.c.l.b16 %v163
    %v241 = vunpack.c.h.b16 %v163
    %v242 = vunpack.c.l.b16 %v164
    %v243 = vunpack.c.h.b16 %v164
    %v244 = vunpack.c.l.b16 %v165
    %v245 = vunpack.c.h.b16 %v165
    %v246 = vunpack.c.l.b16 %v166
    %v247 = vunpack.c.h.b16 %v166
    %v248 = vunpack.c.l.b16 %v167
    %v249 = vunpack.c.h.b16 %v167
    %v250 = vunpack.c.l.b16 %v168
    %v251 = vunpack.c.h.b16 %v168
    %v252 = vunpack.c.l.b16 %v169
    %v253 = vunpack.c.h.b16 %v169
    %v254 = vunpack.c.l.b16 %v170
    %v255 = vunpack.c.h.b16 %v170
    %v256 = vunpack.c.l.b16 %v171
    %v257 = vunpack.c.h.b16 %v171
    %v258 = vunpack.c.l.b16 %v172
    %v259 = vunpack.c.h.b16 %v172
    %v260 = vunpack.c.l.b16 %v173
    %v261 = vunpack.c.h.b16 %v173
    %v262 = vunpack.c.l.b16 %v174
    %v263 = vunpack.c.h.b16 %v174
    %v264 = vunpack.c.l.b16 %v175
    %v265 = vunpack.c.h.b16 %v175
    %v266 = vunpack.c.l.b16 %v176
    %v267 = vunpack.c.h.b16 %v176
    %v268 = vunpack.c.l.b16 %v177
    %v269 = vunpack.c.h.b16 %v177
    %v270 = vunpack.c.l.b16 %v178
    %v271 = vunpack.c.h.b16 %v178
    %v272 = vunpack.c.l.b16 %v179
    %v273 = vunpack.c.h.b16 %v179
    %v274 = vunpack.c.l.b16 %v180
    %v275 = vunpack.c.h.b16 %v180
    %v276 = vunpack.c.l.b16 %v181
    %v277 = vunpack.c.h.b16 %v181
    %v278 = vunpack.c.l.b16 %v182
    %v279 = vunpack.c.h.b16 %v182
    %v280 = vunpack.c.l.b16 %v183
    %v281 = vunpack.c.h.b16 %v183
    %v282 = vunpack.c.l.b16 %v184
    %v283 = vunpack.c.h.b16 %v184
    %v284 = vunpack.c.l.b16 %v185
    %v285 = vunpack.c.h.b16 %v185
    %v286 = vunpack.c.l.b16 %v186
    %v287 = vunpack.c.h.b16 %v186
    %v288 = vunpack.c.l.b16 %v187
    %v289 = vunpack.c.h.b16 %v187
    %v290 = vpack.c.b16 %v228, %v226
    %v291 = vpack.c.b16 %v229, %v227
    %v292 = vpack.c.b16 %v232, %v230
    %v293 = vpack.c.b16 %v233, %v231
    %v294 = vpack.c.b16 %v236, %v234
    %v295 = vpack.c.b16 %v237, %v235
    %v296 = vpack.c.b16 %v240, %v238
    %v297 = vpack.c.b16 %v241, %v239
    %v298 = vpack.c.b16 %v244, %v242
    %v299 = vpack.c.b16 %v245, %v243
    %v300 = vpack.c.b16 %v248, %v246
    %v301 = vpack.c.b16 %v249, %v247
    %v302 = vpack.c.b16 %v252, %v250
    %v303 = vpack.c.b16 %v253, %v251
    %v304 = vpack.c.b16 %v256, %v254
    %v305 = vpack.c.b16 %v257, %v255
    %v306 = vpack.c.b16 %v260, %v258
    %v307 = vpack.c.b16 %v261, %v259
    %v308 = vpack.c.b16 %v264, %v262
    %v309 = vpack.c.b16 %v265, %v263
    %v310 = vpack.c.b16 %v268, %v266
    %v311 = vpack.c.b16 %v269, %v267
    %v312 = vpack.c.b16 %v272, %v270
    %v313 = vpack.c.b16 %v273, %v271
    %v314 = vpack.c.b16 %v276, %v274
    %v315 = vpack.c.b16 %v277, %v275
    %v316 = vpack.c.b16 %v280, %v278
    %v317 = vpack.c.b16 %v281, %v279
    %v318 = vpack.c.b16 %v284, %v282
    %v319 = vpack.c.b16 %v285, %v283
    %v320 = vpack.c.b16 %v288, %v286
    %v321 = vpack.c.b16 %v289, %v287
    %354 = vmatpush.bf16.msra.mxu0 %v304
    %355 = vmatpush.bf16.msra.mxu0 %v302
    %356 = vmatpush.bf16.msra.mxu0 %v300
    %357 = vmatpush.bf16.msra.mxu0 %v298
    %358 = vmatpush.bf16.msra.mxu0 %v296
    %359 = vmatpush.bf16.msra.mxu0 %v294
    %360 = vmatpush.bf16.msra.mxu0 %v292
    %361 = vmatpush.bf16.msra.mxu0 %v290
    %362 = vmatmul.bf16.gmra.mxu0 %v154
    %v363 = vpop.f32.mrf.mxu0
    %v364 = vadd.f32 %v190, %v363
    %v365 = vpop.f32.mrf.mxu0
    %366 = vdwg.mxu0
    %367 = vmatpush.bf16.msra.mxu0 %v320
    %368 = vmatpush.bf16.msra.mxu0 %v318
    %369 = vmatpush.bf16.msra.mxu0 %v316
    %370 = vmatpush.bf16.msra.mxu0 %v314
    %371 = vmatpush.bf16.msra.mxu0 %v312
    %372 = vmatpush.bf16.msra.mxu0 %v310
    %373 = vmatpush.bf16.msra.mxu0 %v308
    %374 = vmatpush.bf16.msra.mxu0 %v306
    %375 = vmatmul.bf16.gmra.mxu0 %v155
    %v376 = vpop.f32.mrf.mxu0
    %v377 = vadd.f32 %v364, %v376
    %v378 = vpop.f32.mrf.mxu0
    %379 = vdwg.mxu0
    %380 = vmatpush.bf16.msra.mxu0 %v305
    %381 = vmatpush.bf16.msra.mxu0 %v303
    %382 = vmatpush.bf16.msra.mxu0 %v301
    %383 = vmatpush.bf16.msra.mxu0 %v299
    %384 = vmatpush.bf16.msra.mxu0 %v297
    %385 = vmatpush.bf16.msra.mxu0 %v295
    %386 = vmatpush.bf16.msra.mxu0 %v293
    %387 = vmatpush.bf16.msra.mxu0 %v291
    %388 = vmatmul.bf16.gmra.mxu0 %v154
    %v389 = vpop.f32.mrf.mxu0
    %v390 = vadd.f32 %v191, %v389
    %v391 = vpop.f32.mrf.mxu0
    %392 = vdwg.mxu0
    %393 = vmatpush.bf16.msra.mxu0 %v321
    %394 = vmatpush.bf16.msra.mxu0 %v319
    %395 = vmatpush.bf16.msra.mxu0 %v317
    %396 = vmatpush.bf16.msra.mxu0 %v315
    %397 = vmatpush.bf16.msra.mxu0 %v313
    %398 = vmatpush.bf16.msra.mxu0 %v311
    %399 = vmatpush.bf16.msra.mxu0 %v309
    %400 = vmatpush.bf16.msra.mxu0 %v307
    %401 = vmatmul.bf16.gmra.mxu0 %v155
    %v402 = vpop.f32.mrf.mxu0
    %v403 = vadd.f32 %v390, %v402
    %v404 = vpop.f32.mrf.mxu0
    %405 = vdwg.mxu0
    %v406 = vmax.f32 %v377, 0.0
    %v407 = vmax.f32 %v403, 0.0
    %v408 = vpack.c.bf16 %v406, %v406
    %v409 = vpack.c.bf16 %v407, %v407
    %v410 = vld [vmem:[#allocation10] sm:$0xf]
    %v411 = vld [vmem:[#allocation10 + $0x4] sm:$0xf]
    %v412 = vld [vmem:[#allocation10 + $0x8] sm:$0xf]
    %v413 = vld [vmem:[#allocation10 + $0xc] sm:$0xf]
    %v414 = vld [vmem:[#allocation10 + $0x10] sm:$0xf]
    %v415 = vld [vmem:[#allocation10 + $0x14] sm:$0xf]
    %v416 = vld [vmem:[#allocation10 + $0x18] sm:$0xf]
    %v417 = vld [vmem:[#allocation10 + $0x1c] sm:$0xf]
    %v418 = vld [vmem:[#allocation10 + $0x20] sm:$0xf]
    %v419 = vld [vmem:[#allocation10 + $0x24] sm:$0xf]
    %v420 = vld [vmem:[#allocation10 + $0x28] sm:$0xf]
    %v421 = vld [vmem:[#allocation10 + $0x2c] sm:$0xf]
    %v422 = vld [vmem:[#allocation10 + $0x30] sm:$0xf]
    %v423 = vld [vmem:[#allocation10 + $0x34] sm:$0xf]
    %v424 = vld [vmem:[#allocation10 + $0x38] sm:$0xf]
    %v425 = vld [vmem:[#allocation10 + $0x3c] sm:$0xf]
    %v426 = vld [vmem:[#allocation10 + $0x40] sm:$0xf]
    %v427 = vld [vmem:[#allocation10 + $0x44] sm:$0xf]
    %v428 = vld [vmem:[#allocation10 + $0x48] sm:$0xf]
    %v429 = vld [vmem:[#allocation10 + $0x4c] sm:$0xf]
    %v430 = vld [vmem:[#allocation10 + $0x50] sm:$0xf]
    %v431 = vld [vmem:[#allocation10 + $0x54] sm:$0xf]
    %v432 = vld [vmem:[#allocation10 + $0x58] sm:$0xf]
    %v433 = vld [vmem:[#allocation10 + $0x5c] sm:$0xf]
    %v434 = vld [vmem:[#allocation10 + $0x60] sm:$0xf]
    %v435 = vld [vmem:[#allocation10 + $0x64] sm:$0xf]
    %v436 = vld [vmem:[#allocation10 + $0x68] sm:$0xf]
    %v437 = vld [vmem:[#allocation10 + $0x6c] sm:$0xf]
    %v438 = vld [vmem:[#allocation10 + $0x70] sm:$0xf]
    %v439 = vld [vmem:[#allocation10 + $0x74] sm:$0xf]
    %v440 = vld [vmem:[#allocation10 + $0x78] sm:$0xf]
    %v441 = vld [vmem:[#allocation10 + $0x7c] sm:$0xf]
    %v474 = vunpack.c.l.b16 %v410
    %v475 = vunpack.c.l.b16 %v411
    %v476 = vunpack.c.l.b16 %v412
    %v477 = vunpack.c.l.b16 %v413
    %v478 = vunpack.c.l.b16 %v414
    %v479 = vunpack.c.l.b16 %v415
    %v480 = vunpack.c.l.b16 %v416
    %v481 = vunpack.c.l.b16 %v417
    %v482 = vunpack.c.l.b16 %v418
    %v483 = vunpack.c.l.b16 %v419
    %v484 = vunpack.c.l.b16 %v420
    %v485 = vunpack.c.l.b16 %v421
    %v486 = vunpack.c.l.b16 %v422
    %v487 = vunpack.c.l.b16 %v423
    %v488 = vunpack.c.l.b16 %v424
    %v489 = vunpack.c.l.b16 %v425
    %v490 = vunpack.c.l.b16 %v426
    %v491 = vunpack.c.l.b16 %v427
    %v492 = vunpack.c.l.b16 %v428
    %v493 = vunpack.c.l.b16 %v429
    %v494 = vunpack.c.l.b16 %v430
    %v495 = vunpack.c.l.b16 %v431
    %v496 = vunpack.c.l.b16 %v432
    %v497 = vunpack.c.l.b16 %v433
    %v498 = vunpack.c.l.b16 %v434
    %v499 = vunpack.c.l.b16 %v435
    %v500 = vunpack.c.l.b16 %v436
    %v501 = vunpack.c.l.b16 %v437
    %v502 = vunpack.c.l.b16 %v438
    %v503 = vunpack.c.l.b16 %v439
    %v504 = vunpack.c.l.b16 %v440
    %v505 = vunpack.c.l.b16 %v441
    %v506 = vpack.c.b16 %v475, %v474
    %v507 = vpack.c.b16 %v477, %v476
    %v508 = vpack.c.b16 %v479, %v478
    %v509 = vpack.c.b16 %v481, %v480
    %v510 = vpack.c.b16 %v483, %v482
    %v511 = vpack.c.b16 %v485, %v484
    %v512 = vpack.c.b16 %v487, %v486
    %v513 = vpack.c.b16 %v489, %v488
    %v514 = vpack.c.b16 %v491, %v490
    %v515 = vpack.c.b16 %v493, %v492
    %v516 = vpack.c.b16 %v495, %v494
    %v517 = vpack.c.b16 %v497, %v496
    %v518 = vpack.c.b16 %v499, %v498
    %v519 = vpack.c.b16 %v501, %v500
    %v520 = vpack.c.b16 %v503, %v502
    %v521 = vpack.c.b16 %v505, %v504
    %538 = vmatpush.bf16.msra.mxu0 %v513
    %539 = vmatpush.bf16.msra.mxu0 %v512
    %540 = vmatpush.bf16.msra.mxu0 %v511
    %541 = vmatpush.bf16.msra.mxu0 %v510
    %542 = vmatpush.bf16.msra.mxu0 %v509
    %543 = vmatpush.bf16.msra.mxu0 %v508
    %544 = vmatpush.bf16.msra.mxu0 %v507
    %545 = vmatpush.bf16.msra.mxu0 %v506
    %546 = vmatmul.bf16.gmra.mxu0 %v408
    %v547 = vpop.f32.mrf.mxu0
    %v548 = vadd.f32 0.0, %v547
    %v549 = vpop.f32.mrf.mxu0
    %550 = vdwg.mxu0
    %551 = vmatpush.bf16.msra.mxu0 %v521
    %552 = vmatpush.bf16.msra.mxu0 %v520
    %553 = vmatpush.bf16.msra.mxu0 %v519
    %554 = vmatpush.bf16.msra.mxu0 %v518
    %555 = vmatpush.bf16.msra.mxu0 %v517
    %556 = vmatpush.bf16.msra.mxu0 %v516
    %557 = vmatpush.bf16.msra.mxu0 %v515
    %558 = vmatpush.bf16.msra.mxu0 %v514
    %559 = vmatmul.bf16.gmra.mxu0 %v409
    %v560 = vpop.f32.mrf.mxu0
    %v561 = vadd.f32 %v548, %v560
    %v562 = vpop.f32.mrf.mxu0
    %563 = vdwg.mxu0
    %v564 = vld [vmem:[%s6] sm:$0x1]
    %v566 = vperm.slane %v564, 0
    %v568 = vadd.f32 %v561, %v566
    %v569 = vtanh.pop %v568
    %vm570 = vcmask 58368
    %571 = vst.msk [vmem:[#allocation11] sm:$0x3] %vm570, %v569
    // Predicated region
    $region50: #{tpu_custom_call.1} parent=1 // pred_check
      _
    $region51: #{tpu_custom_call.1} parent=1 // pred_check_branch
      %573 = sbr.rel (0) target = $region53
    $region52: #{tpu_custom_call.1} parent=1 // pred_region
      %575 = vsyncadd [#allocation4], 0
      %s577 = sshll.u32 [#allocation11], 4
      %s578 = int_to_ptr.vmem [resolvable:$true] %s577
      %s579 = sshll.u32 %s7, 4
      %s580 = int_to_ptr.hbm [resolvable:$true] %s579
      %582 = dma.vmem_to_hbm [thread:$0]  %s578, 32, %s580, [#allocation4]
    $region53: #{tpu_custom_call.1} parent=1 // pred_fallthru
      _
    // Predicated region
    $region54: #{tpu_custom_call.1} parent=1 // pred_check
      _
    $region55: #{tpu_custom_call.1} parent=1 // pred_check_branch
      %584 = sbr.rel (0) target = $region57
    $region56: #{tpu_custom_call.1} parent=1 // pred_region
      %586 = dma.done [#allocation4], 32
    $region57: #{tpu_custom_call.1} parent=1 // pred_fallthru
      _
    %587 = vsyncpa [#allocation3], 1
    %588 = vsyncpa [#allocation6], 1
    %589 = vsyncpa [#allocation9], 1
    %590 = vsyncpa [#allocation4], 1

</llo_original>
